<compile_context>
chip_gen: v7x
topology: tpu7x:2x2x1
jax: 0.10.0
libtpu: 0.0.40
codegen_flags: <defaults>
</compile_context>

<pallas_src>
import jax
import jax.numpy as jnp
from jax import lax
from jax.experimental import pallas as pl
from jax.experimental.pallas import tpu as pltpu

# ------------------------- problem sizes (synthetic) -------------------------
NUM_CLASSES = 4          # "isinstanceof" classes
PER_CLASS = 4            # instances per class
NUM_CONCEPTS = NUM_CLASSES * PER_CLASS
EMBED_DIM = 32           # concept embedding dim
HIDDEN_DIM = 32          # relation-head hidden dim
NUM_RELATIONS = 8        # relation logits (synonym=0, hypernym=2, samekind=3, meronym=4)
SAMEKIND_IDX = 3
NUM_SAMPLE = 8           # num_sample argument to forward()


# --------------------------------- kernel ------------------------------------
def _hier_superviser_kernel(pairs_ref, table_t_ref, w1t_ref, w2row_ref, bias_ref,
                            loss_ref, corr_ref):
    """Embedding gather + fused relation MLP ('samekind' only) + BCE + correctness.

    pairs   : (3, N) i32   rows = [idx1, idx2, is_pos]
    table_t : (D, C) f32   transposed concept-embedding table
    w1t     : (H, 3D) f32  fused+transposed first-layer weight over [e1,e2,e1*e2]
    w2row   : (1, H) f32   'samekind' row of the second-layer weight
    bias    : (H+1, 1) f32 rows 0..H-1 = b1, row H = b2[samekind]
    loss    : (1,) f32     mean BCE-with-logits (SMEM scalar)
    corr    : (1, N) f32   per-sample correctness (lane-dense)
    """
    c, n = table_t_ref.shape[1], pairs_ref.shape[1]
    h_dim = w1t_ref.shape[0]

    pairs = pairs_ref[...]                                  # (3, N) i32
    idx1 = pairs[0:1, :]                                    # (1, N)
    idx2 = pairs[1:2, :]
    y = pairs[2:3, :].astype(jnp.float32)                   # (1, N) 0/1 labels

    # --- embedding gather on the MXU:  e_k^T = table^T @ onehot(idx_k) -------
    row = lax.broadcasted_iota(jnp.int32, (c, n), 0)        # (C, N)
    oh1 = (row == idx1).astype(jnp.float32)                 # (C, N)
    oh2 = (row == idx2).astype(jnp.float32)
    t_t = table_t_ref[...]                                  # (D, C)
    e1 = jnp.dot(t_t, oh1, preferred_element_type=jnp.float32)   # (D, N)
    e2 = jnp.dot(t_t, oh2, preferred_element_type=jnp.float32)   # (D, N)

    # --- fused first layer over [e1; e2; e1*e2] (single MXU push, K = 3D) ----
    x = jnp.concatenate([e1, e2, e1 * e2], axis=0)          # (3D, N)
    hid = jnp.maximum(
        jnp.dot(w1t_ref[...], x, preferred_element_type=jnp.float32)
        + bias_ref[0:h_dim, :], 0.0)                        # (H, N)

    # --- 'samekind' score only: (1,H) @ (H,N) + b2[samekind] -----------------
    s = (jnp.dot(w2row_ref[...], hid, preferred_element_type=jnp.float32)
         + bias_ref[h_dim:h_dim + 1, :])                    # (1, N)

    # --- numerically stable BCE-with-logits (mean reduction) -----------------
    per = jnp.maximum(s, 0.0) - s * y + jnp.log1p(jnp.exp(-jnp.abs(s)))
    loss_ref[0] = jnp.sum(per) / n

    # is_corrects = ((scores > 0).float() == gts)
    corr_ref[...] = ((s > 0.0).astype(jnp.float32) == y).astype(jnp.float32)


# -------------------------------- wrapper ------------------------------------
@jax.jit
def hier_superviser_forward(idx1, idx2, is_pos,
                            embedding_table, w1a, w1b, w1c, b1, w2, b2):
    n = idx1.shape[0]
    num_concepts, d = embedding_table.shape
    hdim = w1a.shape[1]

    # Parameter packing (cheap, once-per-call XLA ops; in a real model these
    # would be precomputed).  Collapses the 9 tiny kernel inputs down to 5.
    pairs = jnp.stack([idx1.astype(jnp.int32),
                       idx2.astype(jnp.int32),
                       is_pos.astype(jnp.int32)], axis=0)           # (3, N)
    table_t = embedding_table.T                                     # (D, C)
    w1t = jnp.concatenate([w1a, w1b, w1c], axis=0).T                # (H, 3D)
    w2row = w2[:, SAMEKIND_IDX:SAMEKIND_IDX + 1].T                  # (1, H)
    bias = jnp.concatenate(
        [b1.reshape(hdim, 1), b2[:, SAMEKIND_IDX:SAMEKIND_IDX + 1]],
        axis=0)                                                     # (H+1, 1)

    flops = 2 * n * (2 * d * num_concepts + 3 * d * hdim + hdim) + 16 * n
    bytes_accessed = 4 * (3 * n + d * num_concepts + 3 * d * hdim
                          + hdim + (hdim + 1) + n + 1)

    vmem = pltpu.MemorySpace.VMEM
    smem = pltpu.MemorySpace.SMEM
    # NOTE: if NUM_SAMPLE is ever batched up (>= a few hundred), add a grid
    # over N with dimension_semantics=("parallel",) so both v7x TensorCores
    # are used; at N=8 a single gridless call is optimal.
    loss, corr = pl.pallas_call(
        _hier_superviser_kernel,
        out_shape=(
            jax.ShapeDtypeStruct((1,), jnp.float32),      # loss  (SMEM scalar)
            jax.ShapeDtypeStruct((1, n), jnp.float32),    # corr  (lane-dense)
        ),
        in_specs=[pl.BlockSpec(memory_space=vmem)] * 5,
        out_specs=(pl.BlockSpec(memory_space=smem),
                   pl.BlockSpec(memory_space=vmem)),
        cost_estimate=pl.CostEstimate(flops=flops, transcendentals=2 * n,
                                      bytes_accessed=bytes_accessed),
    )(pairs, table_t, w1t, w2row, bias)
    return loss[0], corr[0]


# --------------------------- pure-JAX reference -------------------------------
def _reference(embedding_table, idx1, idx2, is_pos, w1a, w1b, w1c, b1, w2, b2):
    e1 = jnp.take(embedding_table, idx1, axis=0)
    e2 = jnp.take(embedding_table, idx2, axis=0)
    h = jnp.maximum(e1 @ w1a + e2 @ w1b + (e1 * e2) @ w1c + b1, 0.0)
    logits = h @ w2 + b2
    s = logits[:, SAMEKIND_IDX]
    y = is_pos.astype(jnp.float32)
    per = jnp.maximum(s, 0.0) - s * y + jnp.log1p(jnp.exp(-jnp.abs(s)))
    loss = jnp.mean(per)
    corr = ((s > 0.0).astype(jnp.float32) == y).astype(jnp.float32)
    return loss, corr


# ----------------------------------- main -------------------------------------
if __name__ == "__main__":
    key = jax.random.PRNGKey(0)
    (k_emb, k_w1a, k_w1b, k_w1c, k_w2,
     k_pos, k_cls1, k_inst1, k_off, k_cls2, k_inst2) = jax.random.split(key, 11)

    # deterministic "taxonomy" parameters
    embedding_table = jax.random.normal(k_emb, (NUM_CONCEPTS, EMBED_DIM), jnp.float32) * 0.5
    w1a = jax.random.normal(k_w1a, (EMBED_DIM, HIDDEN_DIM), jnp.float32) * 0.1
    w1b = jax.random.normal(k_w1b, (EMBED_DIM, HIDDEN_DIM), jnp.float32) * 0.1
    w1c = jax.random.normal(k_w1c, (EMBED_DIM, HIDDEN_DIM), jnp.float32) * 0.1
    b1 = jnp.zeros((1, HIDDEN_DIM), jnp.float32)
    w2 = jax.random.normal(k_w2, (HIDDEN_DIM, NUM_RELATIONS), jnp.float32) * 0.1
    b2 = jnp.zeros((1, NUM_RELATIONS), jnp.float32)

    # sampling glue (always the 'samekind' branch, as in the PyTorch forward)
    is_pos = jax.random.uniform(k_pos, (NUM_SAMPLE,)) > 0.5
    cls1 = jax.random.randint(k_cls1, (NUM_SAMPLE,), 0, NUM_CLASSES)
    inst1 = jax.random.randint(k_inst1, (NUM_SAMPLE,), 0, PER_CLASS)
    off = jax.random.randint(k_off, (NUM_SAMPLE,), 1, PER_CLASS)     # distinct instance
    cls2_neg = jax.random.randint(k_cls2, (NUM_SAMPLE,), 0, NUM_CLASSES)
    inst2_neg = jax.random.randint(k_inst2, (NUM_SAMPLE,), 0, PER_CLASS)

    idx1 = cls1 * PER_CLASS + inst1
    idx2_pos = cls1 * PER_CLASS + (inst1 + off) % PER_CLASS
    idx2_neg = cls2_neg * PER_CLASS + inst2_neg
    idx2 = jnp.where(is_pos, idx2_pos, idx2_neg)

    loss, corr = hier_superviser_forward(idx1, idx2, is_pos,
                                         embedding_table, w1a, w1b, w1c, b1, w2, b2)
    jax.block_until_ready((loss, corr))

    ref_loss, ref_corr = _reference(embedding_table, idx1, idx2, is_pos,
                                    w1a, w1b, w1c, b1, w2, b2)
    assert jnp.allclose(loss, ref_loss, atol=1e-4), (loss, ref_loss)
    assert jnp.array_equal(corr, ref_corr), (corr, ref_corr)

    print("KERNEL_OK")
</pallas_src>

<mosaic_0001>
module attributes {stable_mosaic.version = 11 : i64} {
  func.func @_hier_superviser_kernel(%arg0: memref<3x8xi32, #tpu.memory_space<vmem>>, %arg1: memref<32x16xf32, #tpu.memory_space<vmem>>, %arg2: memref<32x96xf32, #tpu.memory_space<vmem>>, %arg3: memref<1x32xf32, #tpu.memory_space<vmem>>, %arg4: memref<33x1xf32, #tpu.memory_space<vmem>>, %arg5: memref<1xf32, #tpu.memory_space<smem>>, %arg6: memref<1x8xf32, #tpu.memory_space<vmem>>) attributes {dimension_semantics = [], scalar_prefetch = 0 : i64, scratch_operands = 0 : i64, tpu.core_type = #tpu.core_type<tc>} {
    %c0 = arith.constant 0 : index
    %c0_0 = arith.constant 0 : index
    %0 = vector.load %arg0[%c0, %c0_0] : memref<3x8xi32, #tpu.memory_space<vmem>>, vector<3x8xi32>
    %1 = vector.extract_strided_slice %0 {offsets = [0, 0], sizes = [1, 8], strides = [1, 1]} : vector<3x8xi32> to vector<1x8xi32>
    %2 = vector.extract_strided_slice %0 {offsets = [1, 0], sizes = [1, 8], strides = [1, 1]} : vector<3x8xi32> to vector<1x8xi32>
    %3 = vector.extract_strided_slice %0 {offsets = [2, 0], sizes = [1, 8], strides = [1, 1]} : vector<3x8xi32> to vector<1x8xi32>
    %4 = arith.sitofp %3 : vector<1x8xi32> to vector<1x8xf32>
    %5 = tpu.iota {dimensions = array<i32: 0>} : vector<16x8xi32>
    %6 = vector.broadcast %1 : vector<1x8xi32> to vector<16x8xi32>
    %7 = arith.cmpi eq, %5, %6 : vector<16x8xi32>
    %8 = arith.extui %7 : vector<16x8xi1> to vector<16x8xi32>
    %9 = arith.sitofp %8 : vector<16x8xi32> to vector<16x8xf32>
    %10 = vector.broadcast %2 : vector<1x8xi32> to vector<16x8xi32>
    %11 = arith.cmpi eq, %5, %10 : vector<16x8xi32>
    %12 = arith.extui %11 : vector<16x8xi1> to vector<16x8xi32>
    %13 = arith.sitofp %12 : vector<16x8xi32> to vector<16x8xf32>
    %c0_1 = arith.constant 0 : index
    %c0_2 = arith.constant 0 : index
    %14 = vector.load %arg1[%c0_1, %c0_2] : memref<32x16xf32, #tpu.memory_space<vmem>>, vector<32x16xf32>
    %cst = arith.constant dense<0.000000e+00> : vector<32x8xf32>
    %15 = tpu.matmul %14, %9, %cst {dimension_numbers = #tpu.dot_dimension_numbers<[1], [0], [0], [1], [0, 0, 1, 1], [], []>} : vector<32x16xf32>, vector<16x8xf32>, vector<32x8xf32> -> vector<32x8xf32>
    %cst_3 = arith.constant dense<0.000000e+00> : vector<32x8xf32>
    %16 = tpu.matmul %14, %13, %cst_3 {dimension_numbers = #tpu.dot_dimension_numbers<[1], [0], [0], [1], [0, 0, 1, 1], [], []>} : vector<32x16xf32>, vector<16x8xf32>, vector<32x8xf32> -> vector<32x8xf32>
    %17 = arith.mulf %15, %16 : vector<32x8xf32>
    %18 = tpu.concatenate %15, %16, %17 in 0 : vector<32x8xf32>, vector<32x8xf32>, vector<32x8xf32> -> vector<96x8xf32>
    %c0_4 = arith.constant 0 : index
    %c0_5 = arith.constant 0 : index
    %19 = vector.load %arg2[%c0_4, %c0_5] : memref<32x96xf32, #tpu.memory_space<vmem>>, vector<32x96xf32>
    %cst_6 = arith.constant dense<0.000000e+00> : vector<32x8xf32>
    %20 = tpu.matmul %19, %18, %cst_6 {dimension_numbers = #tpu.dot_dimension_numbers<[1], [0], [0], [1], [0, 0, 1, 1], [], []>} : vector<32x96xf32>, vector<96x8xf32>, vector<32x8xf32> -> vector<32x8xf32>
    %c0_7 = arith.constant 0 : index
    %c0_8 = arith.constant 0 : index
    %21 = vector.load %arg4[%c0_7, %c0_8] : memref<33x1xf32, #tpu.memory_space<vmem>>, vector<32x1xf32>
    %22 = vector.broadcast %21 : vector<32x1xf32> to vector<32x8xf32>
    %23 = arith.addf %20, %22 : vector<32x8xf32>
    %cst_9 = arith.constant 0.000000e+00 : f32
    %24 = vector.broadcast %cst_9 : f32 to vector<32x8xf32>
    %25 = arith.maximumf %23, %24 : vector<32x8xf32>
    %c0_10 = arith.constant 0 : index
    %c0_11 = arith.constant 0 : index
    %26 = vector.load %arg3[%c0_10, %c0_11] : memref<1x32xf32, #tpu.memory_space<vmem>>, vector<1x32xf32>
    %cst_12 = arith.constant dense<0.000000e+00> : vector<1x8xf32>
    %27 = tpu.matmul %26, %25, %cst_12 {dimension_numbers = #tpu.dot_dimension_numbers<[1], [0], [0], [1], [0, 0, 1, 1], [], []>} : vector<1x32xf32>, vector<32x8xf32>, vector<1x8xf32> -> vector<1x8xf32>
    %c32 = arith.constant 32 : index
    %c0_13 = arith.constant 0 : index
    %28 = vector.load %arg4[%c32, %c0_13] : memref<33x1xf32, #tpu.memory_space<vmem>>, vector<1x1xf32>
    %29 = vector.broadcast %28 : vector<1x1xf32> to vector<1x8xf32>
    %30 = arith.addf %27, %29 : vector<1x8xf32>
    %cst_14 = arith.constant 0.000000e+00 : f32
    %31 = vector.broadcast %cst_14 : f32 to vector<1x8xf32>
    %32 = arith.maximumf %30, %31 : vector<1x8xf32>
    %33 = arith.mulf %30, %4 : vector<1x8xf32>
    %34 = arith.subf %32, %33 : vector<1x8xf32>
    %35 = math.absf %30 : vector<1x8xf32>
    %cst_15 = arith.constant 0.000000e+00 : f32
    %36 = vector.broadcast %cst_15 : f32 to vector<1x8xf32>
    %37 = arith.subf %36, %35 : vector<1x8xf32>
    %38 = math.exp %37 : vector<1x8xf32>
    %39 = math.log1p %38 : vector<1x8xf32>
    %40 = arith.addf %34, %39 : vector<1x8xf32>
    %41 = vector.shape_cast %40 : vector<1x8xf32> to vector<1x1x8xf32>
    %cst_16 = arith.constant dense<0.000000e+00> : vector<1xf32>
    %42 = vector.multi_reduction <add>, %41, %cst_16 [1, 2] : vector<1x1x8xf32> to vector<1xf32>
    %43 = vector.shape_cast %42 : vector<1xf32> to vector<1x1x1xf32>
    %44 = vector.extract %43[0, 0, 0] : f32 from vector<1x1x1xf32>
    %cst_17 = arith.constant 8.000000e+00 : f32
    %45 = arith.divf %44, %cst_17 : f32
    %c0_18 = arith.constant 0 : index
    %46 = memref.load %arg5[%c0_18] : memref<1xf32, #tpu.memory_space<smem>>
    memref.store %45, %arg5[%c0_18] : memref<1xf32, #tpu.memory_space<smem>>
    %cst_19 = arith.constant 0.000000e+00 : f32
    %47 = vector.broadcast %cst_19 : f32 to vector<1x8xf32>
    %48 = arith.cmpf ogt, %30, %47 : vector<1x8xf32>
    %49 = arith.extui %48 : vector<1x8xi1> to vector<1x8xi32>
    %50 = arith.sitofp %49 : vector<1x8xi32> to vector<1x8xf32>
    %51 = arith.cmpf oeq, %50, %4 : vector<1x8xf32>
    %52 = arith.extui %51 : vector<1x8xi1> to vector<1x8xi32>
    %53 = arith.sitofp %52 : vector<1x8xi32> to vector<1x8xf32>
    %c0_20 = arith.constant 0 : index
    %c0_21 = arith.constant 0 : index
    %54 = vector.load %arg6[%c0_20, %c0_21] : memref<1x8xf32, #tpu.memory_space<vmem>>, vector<1x8xf32>
    tpu.vector_store %arg6[%c0_20, %c0_21], %53 {strides = array<i32>} : memref<1x8xf32, #tpu.memory_space<vmem>>, vector<1x8xf32>,
    return
  }
}

</mosaic_0001>

<llo_original>
// kernel: hier_superviser_forward.1
$region0: #{hier_superviser_forward.1}
  #allocation0 [shape = 'u32[]', space=smem, size = 0x4, offset = 0x4, fixed_abs, tag = 'smem constant byte address 0x4 - core index']
  #allocation1 [shape = 'u32[144,128]{1,0:T(1,128)}', space=vmem, size = 0x12000, scoped, tag = 'internal scratch']
  %s0 = inlined_call_operand.vmem [shape: s32[3,8], index: 0, kind: input, shape index: {}]
  %s1 = inlined_call_operand.vmem [shape: f32[32,16], index: 1, kind: input, shape index: {}]
  %s2 = inlined_call_operand.vmem [shape: f32[32,96], index: 2, kind: input, shape index: {}]
  %s3 = inlined_call_operand.vmem [shape: f32[1,32], index: 3, kind: input, shape index: {}]
  %s4 = inlined_call_operand.vmem [shape: f32[33,1], index: 4, kind: input, shape index: {}]
  %s5 = inlined_call_operand.hbm [shape: f32[1], index: 5, kind: output, shape index: {0}]
  %s6 = inlined_call_operand.hbm [shape: f32[1,8], index: 6, kind: output, shape index: {1}]
  %7 = xla_tuple %s5, %s6
  %s8 = sld [smem:[#allocation0]]
  $region38: #{hier_superviser_forward.1} parent=0
    _
  %s10 = ssub.s32 1, %s8
  %s11 = scalar_select 0, %s10, %s8
  $region1: #{hier_superviser_forward.1} parent=0
    #allocation2 [shape = 'u8[512]{0}', space=smem, size = 0x200, scoped, tag = 'output window, operand 0, single buffered']
    #allocation3 [shape = 's32[1]{0}', space=sflag, size = 0x4, scoped, tag = 'scoped memory for hier_superviser_forward.1']
    #allocation4 [shape = 's32[1]{0}', space=sflag, size = 0x4, scoped, tag = 'scoped memory for hier_superviser_forward.1']
    #allocation5 [shape = 'u8[512]{0}', space=vmem, size = 0x400, scoped, tag = 'output window, operand 1, single buffered']
    %12 = vsyncpa [#allocation4], 0
    %13 = vsyncpa [#allocation3], 0
    // Predicated region
    $region2: #{hier_superviser_forward.1} parent=1 // pred_check
      _
    $region3: #{hier_superviser_forward.1} parent=1 // pred_check_branch
      %15 = sbr.rel (0) target = $region5
    $region4: #{hier_superviser_forward.1} parent=1 // pred_region
      _
    $region5: #{hier_superviser_forward.1} parent=1 // pred_fallthru
      _
    // Predicated region
    $region6: #{hier_superviser_forward.1} parent=1 // pred_check
      _
    $region7: #{hier_superviser_forward.1} parent=1 // pred_check_branch
      %17 = sbr.rel (0) target = $region9
    $region8: #{hier_superviser_forward.1} parent=1 // pred_region
      _
    $region9: #{hier_superviser_forward.1} parent=1 // pred_fallthru
      _
    // Predicated region
    $region10: #{hier_superviser_forward.1} parent=1 // pred_check
      _
    $region11: #{hier_superviser_forward.1} parent=1 // pred_check_branch
      %19 = sbr.rel (0) target = $region13
    $region12: #{hier_superviser_forward.1} parent=1 // pred_region
      _
    $region13: #{hier_superviser_forward.1} parent=1 // pred_fallthru
      _
    // Predicated region
    $region14: #{hier_superviser_forward.1} parent=1 // pred_check
      _
    $region15: #{hier_superviser_forward.1} parent=1 // pred_check_branch
      %21 = sbr.rel (0) target = $region17
    $region16: #{hier_superviser_forward.1} parent=1 // pred_region
      _
    $region17: #{hier_superviser_forward.1} parent=1 // pred_fallthru
      _
    // Predicated region
    $region18: #{hier_superviser_forward.1} parent=1 // pred_check
      _
    $region19: #{hier_superviser_forward.1} parent=1 // pred_check_branch
      %23 = sbr.rel (0) target = $region21
    $region20: #{hier_superviser_forward.1} parent=1 // pred_region
      _
    $region21: #{hier_superviser_forward.1} parent=1 // pred_fallthru
      _
    %v24 = vld [vmem:[%s0] sm:$0x7]
    %v25 = vcvt.s32.f32 %v24
    %v26 = vlaneseq
    %v27 = vshrl.u32 %v26, 7
    %v28 = vadd.s32 %v27, 8
    %v29 = vlaneseq
    %v30 = vshrl.u32 %v29, 7
    %v31 = vsub.s32 0, %v30
    %v32 = vrot.slane %v24, %v31
    %vm33 = vcmp.eq.s32.totalorder %v27, %v32
    %vm34 = vcmp.eq.s32.totalorder %v28, %v32
    %v35 = vsel %vm33, 1, 0
    %v36 = vsel %vm34, 1, 0
    %v37 = vcvt.s32.f32 %v35
    %v38 = vcvt.s32.f32 %v36
    %v39 = vlaneseq
    %v40 = vshrl.u32 %v39, 7
    %v41 = vsub.s32 1, %v40
    %v42 = vrot.slane %v24, %v41
    %vm43 = vcmp.eq.s32.totalorder %v27, %v42
    %vm44 = vcmp.eq.s32.totalorder %v28, %v42
    %v45 = vsel %vm43, 1, 0
    %v46 = vsel %vm44, 1, 0
    %v47 = vcvt.s32.f32 %v45
    %v48 = vcvt.s32.f32 %v46
    %v49 = vld [vmem:[%s1] sm:$0xff]
    %v50 = vld [vmem:[%s1 + $0x8] sm:$0xff]
    %v51 = vld [vmem:[%s1 + $0x10] sm:$0xff]
    %v52 = vld [vmem:[%s1 + $0x18] sm:$0xff]
    %vm53 = vcmask 130048
    %v55 = vsel %vm53, %v49, 0
    %v58 = vsel %vm53, %v50, 0
    %v61 = vsel %vm53, %v51, 0
    %v64 = vsel %vm53, %v52, 0
    %66 = vmatprep.subr.mxu0 0.0
    %67 = vmatpush1.msra.mxu0 %v37
    %68 = vmatprep.subr.mxu0 0.0
    %69 = vmatpush1.msra.mxu0 %v38
    %70 = vmatprep.subr.mxu0 0.0
    %71 = vmatpush1.msra.mxu0 0.0
    %72 = vmatprep.subr.mxu0 0.0
    %73 = vmatpush1.msra.mxu0 0.0
    %74 = vmatprep.subr.mxu0 0.0
    %75 = vmatpush1.msra.mxu0 0.0
    %76 = vmatprep.subr.mxu0 0.0
    %77 = vmatpush1.msra.mxu0 0.0
    %78 = vmatprep.subr.mxu0 0.0
    %79 = vmatpush1.msra.mxu0 0.0
    %80 = vmatprep.subr.mxu0 0.0
    %81 = vmatpush1.msra.mxu0 0.0
    %82 = vmatprep.subr.mxu0 0.0
    %83 = vmatpush1.msra.mxu0 0.0
    %84 = vmatprep.subr.mxu0 0.0
    %85 = vmatpush1.msra.mxu0 0.0
    %86 = vmatprep.subr.mxu0 0.0
    %87 = vmatpush1.msra.mxu0 0.0
    %88 = vmatprep.subr.mxu0 0.0
    %89 = vmatpush1.msra.mxu0 0.0
    %90 = vmatprep.subr.mxu0 0.0
    %91 = vmatpush1.msra.mxu0 0.0
    %92 = vmatprep.subr.mxu0 0.0
    %93 = vmatpush1.msra.mxu0 0.0
    %94 = vmatprep.subr.mxu0 0.0
    %95 = vmatpush1.msra.mxu0 0.0
    %96 = vmatprep.subr.mxu0 0.0
    %97 = vmatpush1.msra.mxu0 0.0
    %98 = vmatprep.subr.mxu0 0.0
    %99 = vmatpush1.msra.mxu0 0.0
    %100 = vmatprep.subr.mxu0 0.0
    %101 = vmatpush1.msra.mxu0 0.0
    %102 = vmatprep.subr.mxu0 0.0
    %103 = vmatpush1.msra.mxu0 0.0
    %104 = vmatprep.subr.mxu0 0.0
    %105 = vmatpush1.msra.mxu0 0.0
    %106 = vmatprep.subr.mxu0 0.0
    %107 = vmatpush1.msra.mxu0 0.0
    %108 = vmatprep.subr.mxu0 0.0
    %109 = vmatpush1.msra.mxu0 0.0
    %110 = vmatprep.subr.mxu0 0.0
    %111 = vmatpush1.msra.mxu0 0.0
    %112 = vmatprep.subr.mxu0 0.0
    %113 = vmatpush1.msra.mxu0 0.0
    %114 = vmatprep.subr.mxu0 0.0
    %115 = vmatpush1.msra.mxu0 0.0
    %116 = vmatprep.subr.mxu0 0.0
    %117 = vmatpush1.msra.mxu0 0.0
    %118 = vmatprep.subr.mxu0 0.0
    %119 = vmatpush1.msra.mxu0 0.0
    %120 = vmatprep.subr.mxu0 0.0
    %121 = vmatpush1.msra.mxu0 0.0
    %122 = vmatprep.subr.mxu0 0.0
    %123 = vmatpush1.msra.mxu0 0.0
    %124 = vmatprep.subr.mxu0 0.0
    %125 = vmatpush1.msra.mxu0 0.0
    %126 = vmatprep.subr.mxu0 0.0
    %127 = vmatpush1.msra.mxu0 0.0
    %128 = vmatprep.subr.mxu0 0.0
    %129 = vmatpush1.msra.mxu0 0.0
    %130 = vmatprep.mubr.f32.mxu0 0.0
    %131 = vmatmul.mubr.f32.gmra.mrb[0].mxu0 %v55
    %v132 = vpop.f32.mrb[0].mxu0
    %v133 = vadd.f32 0.0, %v132
    %v134 = vpop.f32.mrb[0].mxu0
    %135 = vmatprep.mubr.f32.mxu0 0.0
    %136 = vmatmul.mubr.f32.gmra.mrb[0].mxu0 %v58
    %v137 = vpop.f32.mrb[0].mxu0
    %v138 = vadd.f32 0.0, %v137
    %v139 = vpop.f32.mrb[0].mxu0
    %140 = vmatprep.mubr.f32.mxu0 0.0
    %141 = vmatmul.mubr.f32.gmra.mrb[0].mxu0 %v61
    %v142 = vpop.f32.mrb[0].mxu0
    %v143 = vadd.f32 0.0, %v142
    %v144 = vpop.f32.mrb[0].mxu0
    %145 = vmatprep.mubr.f32.mxu0 0.0
    %146 = vmatmul.mubr.f32.gmra.mrb[0].mxu0 %v64
    %v147 = vpop.f32.mrb[0].mxu0
    %v148 = vadd.f32 0.0, %v147
    %v149 = vpop.f32.mrb[0].mxu0
    %150 = vdwg.mxu0
    %151 = vmatprep.subr.mxu0 0.0
    %152 = vmatpush1.msra.mxu0 %v47
    %153 = vmatprep.subr.mxu0 0.0
    %154 = vmatpush1.msra.mxu0 %v48
    %155 = vmatprep.subr.mxu0 0.0
    %156 = vmatpush1.msra.mxu0 0.0
    %157 = vmatprep.subr.mxu0 0.0
    %158 = vmatpush1.msra.mxu0 0.0
    %159 = vmatprep.subr.mxu0 0.0
    %160 = vmatpush1.msra.mxu0 0.0
    %161 = vmatprep.subr.mxu0 0.0
    %162 = vmatpush1.msra.mxu0 0.0
    %163 = vmatprep.subr.mxu0 0.0
    %164 = vmatpush1.msra.mxu0 0.0
    %165 = vmatprep.subr.mxu0 0.0
    %166 = vmatpush1.msra.mxu0 0.0
    %167 = vmatprep.subr.mxu0 0.0
    %168 = vmatpush1.msra.mxu0 0.0
    %169 = vmatprep.subr.mxu0 0.0
    %170 = vmatpush1.msra.mxu0 0.0
    %171 = vmatprep.subr.mxu0 0.0
    %172 = vmatpush1.msra.mxu0 0.0
    %173 = vmatprep.subr.mxu0 0.0
    %174 = vmatpush1.msra.mxu0 0.0
    %175 = vmatprep.subr.mxu0 0.0
    %176 = vmatpush1.msra.mxu0 0.0
    %177 = vmatprep.subr.mxu0 0.0
    %178 = vmatpush1.msra.mxu0 0.0
    %179 = vmatprep.subr.mxu0 0.0
    %180 = vmatpush1.msra.mxu0 0.0
    %181 = vmatprep.subr.mxu0 0.0
    %182 = vmatpush1.msra.mxu0 0.0
    %183 = vmatprep.subr.mxu0 0.0
    %184 = vmatpush1.msra.mxu0 0.0
    %185 = vmatprep.subr.mxu0 0.0
    %186 = vmatpush1.msra.mxu0 0.0
    %187 = vmatprep.subr.mxu0 0.0
    %188 = vmatpush1.msra.mxu0 0.0
    %189 = vmatprep.subr.mxu0 0.0
    %190 = vmatpush1.msra.mxu0 0.0
    %191 = vmatprep.subr.mxu0 0.0
    %192 = vmatpush1.msra.mxu0 0.0
    %193 = vmatprep.subr.mxu0 0.0
    %194 = vmatpush1.msra.mxu0 0.0
    %195 = vmatprep.subr.mxu0 0.0
    %196 = vmatpush1.msra.mxu0 0.0
    %197 = vmatprep.subr.mxu0 0.0
    %198 = vmatpush1.msra.mxu0 0.0
    %199 = vmatprep.subr.mxu0 0.0
    %200 = vmatpush1.msra.mxu0 0.0
    %201 = vmatprep.subr.mxu0 0.0
    %202 = vmatpush1.msra.mxu0 0.0
    %203 = vmatprep.subr.mxu0 0.0
    %204 = vmatpush1.msra.mxu0 0.0
    %205 = vmatprep.subr.mxu0 0.0
    %206 = vmatpush1.msra.mxu0 0.0
    %207 = vmatprep.subr.mxu0 0.0
    %208 = vmatpush1.msra.mxu0 0.0
    %209 = vmatprep.subr.mxu0 0.0
    %210 = vmatpush1.msra.mxu0 0.0
    %211 = vmatprep.subr.mxu0 0.0
    %212 = vmatpush1.msra.mxu0 0.0
    %213 = vmatprep.subr.mxu0 0.0
    %214 = vmatpush1.msra.mxu0 0.0
    %215 = vmatprep.mubr.f32.mxu0 0.0
    %216 = vmatmul.mubr.f32.gmra.mrb[0].mxu0 %v55
    %v217 = vpop.f32.mrb[0].mxu0
    %v218 = vadd.f32 0.0, %v217
    %v219 = vpop.f32.mrb[0].mxu0
    %220 = vmatprep.mubr.f32.mxu0 0.0
    %221 = vmatmul.mubr.f32.gmra.mrb[0].mxu0 %v58
    %v222 = vpop.f32.mrb[0].mxu0
    %v223 = vadd.f32 0.0, %v222
    %v224 = vpop.f32.mrb[0].mxu0
    %225 = vmatprep.mubr.f32.mxu0 0.0
    %226 = vmatmul.mubr.f32.gmra.mrb[0].mxu0 %v61
    %v227 = vpop.f32.mrb[0].mxu0
    %v228 = vadd.f32 0.0, %v227
    %v229 = vpop.f32.mrb[0].mxu0
    %230 = vmatprep.mubr.f32.mxu0 0.0
    %231 = vmatmul.mubr.f32.gmra.mrb[0].mxu0 %v64
    %v232 = vpop.f32.mrb[0].mxu0
    %v233 = vadd.f32 0.0, %v232
    %v234 = vpop.f32.mrb[0].mxu0
    %235 = vdwg.mxu0
    %v236 = vmul.f32 %v133, %v218
    %v237 = vmul.f32 %v138, %v223
    %v238 = vmul.f32 %v143, %v228
    %v239 = vmul.f32 %v148, %v233
    %v240 = vld [vmem:[%s2] sm:$0xff]
    %v241 = vld [vmem:[%s2 + $0x8] sm:$0xff]
    %v242 = vld [vmem:[%s2 + $0x10] sm:$0xff]
    %v243 = vld [vmem:[%s2 + $0x18] sm:$0xff]
    %v244 = vld [vmem:[%s4] sm:$0xff]
    %v245 = vld [vmem:[%s4 + $0x8] sm:$0xff]
    %v246 = vld [vmem:[%s4 + $0x10] sm:$0xff]
    %v247 = vld [vmem:[%s4 + $0x18] sm:$0xff]
    %249 = vset.pattern.permute.xlu0 0
    %250 = vperm.xlu0 %249, %v244
    %v251 = vpop.permute.xlu0 %250
    %254 = vset.pattern.permute.xlu0 0
    %255 = vperm.xlu0 %254, %v245
    %v256 = vpop.permute.xlu0 %255
    %259 = vset.pattern.permute.xlu0 0
    %260 = vperm.xlu0 %259, %v246
    %v261 = vpop.permute.xlu0 %260
    %264 = vset.pattern.permute.xlu0 0
    %265 = vperm.xlu0 %264, %v247
    %v266 = vpop.permute.xlu0 %265
    %vm268 = vcmask 785408
    %v270 = vsel %vm268, %v240, 0
    %v273 = vsel %vm268, %v241, 0
    %v276 = vsel %vm268, %v242, 0
    %v279 = vsel %vm268, %v243, 0
    %281 = vmatprep.subr.mxu0 0.0
    %282 = vmatpush1.msra.mxu0 %v133
    %283 = vmatprep.subr.mxu0 0.0
    %284 = vmatpush1.msra.mxu0 %v138
    %285 = vmatprep.subr.mxu0 0.0
    %286 = vmatpush1.msra.mxu0 %v143
    %287 = vmatprep.subr.mxu0 0.0
    %288 = vmatpush1.msra.mxu0 %v148
    %289 = vmatprep.subr.mxu0 0.0
    %290 = vmatpush1.msra.mxu0 %v218
    %291 = vmatprep.subr.mxu0 0.0
    %292 = vmatpush1.msra.mxu0 %v223
    %293 = vmatprep.subr.mxu0 0.0
    %294 = vmatpush1.msra.mxu0 %v228
    %295 = vmatprep.subr.mxu0 0.0
    %296 = vmatpush1.msra.mxu0 %v233
    %297 = vmatprep.subr.mxu0 0.0
    %298 = vmatpush1.msra.mxu0 %v236
    %299 = vmatprep.subr.mxu0 0.0
    %300 = vmatpush1.msra.mxu0 %v237
    %301 = vmatprep.subr.mxu0 0.0
    %302 = vmatpush1.msra.mxu0 %v238
    %303 = vmatprep.subr.mxu0 0.0
    %304 = vmatpush1.msra.mxu0 %v239
    %305 = vmatprep.subr.mxu0 0.0
    %306 = vmatpush1.msra.mxu0 0.0
    %307 = vmatprep.subr.mxu0 0.0
    %308 = vmatpush1.msra.mxu0 0.0
    %309 = vmatprep.subr.mxu0 0.0
    %310 = vmatpush1.msra.mxu0 0.0
    %311 = vmatprep.subr.mxu0 0.0
    %312 = vmatpush1.msra.mxu0 0.0
    %313 = vmatprep.subr.mxu0 0.0
    %314 = vmatpush1.msra.mxu0 0.0
    %315 = vmatprep.subr.mxu0 0.0
    %316 = vmatpush1.msra.mxu0 0.0
    %317 = vmatprep.subr.mxu0 0.0
    %318 = vmatpush1.msra.mxu0 0.0
    %319 = vmatprep.subr.mxu0 0.0
    %320 = vmatpush1.msra.mxu0 0.0
    %321 = vmatprep.subr.mxu0 0.0
    %322 = vmatpush1.msra.mxu0 0.0
    %323 = vmatprep.subr.mxu0 0.0
    %324 = vmatpush1.msra.mxu0 0.0
    %325 = vmatprep.subr.mxu0 0.0
    %326 = vmatpush1.msra.mxu0 0.0
    %327 = vmatprep.subr.mxu0 0.0
    %328 = vmatpush1.msra.mxu0 0.0
    %329 = vmatprep.subr.mxu0 0.0
    %330 = vmatpush1.msra.mxu0 0.0
    %331 = vmatprep.subr.mxu0 0.0
    %332 = vmatpush1.msra.mxu0 0.0
    %333 = vmatprep.subr.mxu0 0.0
    %334 = vmatpush1.msra.mxu0 0.0
    %335 = vmatprep.subr.mxu0 0.0
    %336 = vmatpush1.msra.mxu0 0.0
    %337 = vmatprep.subr.mxu0 0.0
    %338 = vmatpush1.msra.mxu0 0.0
    %339 = vmatprep.subr.mxu0 0.0
    %340 = vmatpush1.msra.mxu0 0.0
    %341 = vmatprep.subr.mxu0 0.0
    %342 = vmatpush1.msra.mxu0 0.0
    %343 = vmatprep.subr.mxu0 0.0
    %344 = vmatpush1.msra.mxu0 0.0
    %345 = vmatprep.mubr.f32.mxu0 0.0
    %346 = vmatmul.mubr.f32.gmra.mrb[0].mxu0 %v270
    %v347 = vpop.f32.mrb[0].mxu0
    %v348 = vadd.f32 %v251, %v347
    %v349 = vpop.f32.mrb[0].mxu0
    %350 = vmatprep.mubr.f32.mxu0 0.0
    %351 = vmatmul.mubr.f32.gmra.mrb[0].mxu0 %v273
    %v352 = vpop.f32.mrb[0].mxu0
    %v353 = vadd.f32 %v256, %v352
    %v354 = vpop.f32.mrb[0].mxu0
    %355 = vmatprep.mubr.f32.mxu0 0.0
    %356 = vmatmul.mubr.f32.gmra.mrb[0].mxu0 %v276
    %v357 = vpop.f32.mrb[0].mxu0
    %v358 = vadd.f32 %v261, %v357
    %v359 = vpop.f32.mrb[0].mxu0
    %360 = vmatprep.mubr.f32.mxu0 0.0
    %361 = vmatmul.mubr.f32.gmra.mrb[0].mxu0 %v279
    %v362 = vpop.f32.mrb[0].mxu0
    %v363 = vadd.f32 %v266, %v362
    %v364 = vpop.f32.mrb[0].mxu0
    %365 = vdwg.mxu0
    %v366 = vmax.f32 %v348, 0.0
    %v367 = vmax.f32 %v353, 0.0
    %v368 = vmax.f32 %v358, 0.0
    %v369 = vmax.f32 %v363, 0.0
    %v370 = vld [vmem:[%s3] sm:$0x1]
    %v371 = vld [vmem:[%s4 + $0x20] sm:$0x1]
    %373 = vset.pattern.permute.xlu0 0
    %374 = vperm.xlu0 %373, %v371
    %v375 = vpop.permute.xlu0 %374
    %vm377 = vcmask 261120
    %v379 = vsel %vm377, %v370, 0
    %381 = vmatprep.subr.mxu0 0.0
    %382 = vmatpush1.msra.mxu0 %v366
    %383 = vmatprep.subr.mxu0 0.0
    %384 = vmatpush1.msra.mxu0 %v367
    %385 = vmatprep.subr.mxu0 0.0
    %386 = vmatpush1.msra.mxu0 %v368
    %387 = vmatprep.subr.mxu0 0.0
    %388 = vmatpush1.msra.mxu0 %v369
    %389 = vmatprep.subr.mxu0 0.0
    %390 = vmatpush1.msra.mxu0 0.0
    %391 = vmatprep.subr.mxu0 0.0
    %392 = vmatpush1.msra.mxu0 0.0
    %393 = vmatprep.subr.mxu0 0.0
    %394 = vmatpush1.msra.mxu0 0.0
    %395 = vmatprep.subr.mxu0 0.0
    %396 = vmatpush1.msra.mxu0 0.0
    %397 = vmatprep.subr.mxu0 0.0
    %398 = vmatpush1.msra.mxu0 0.0
    %399 = vmatprep.subr.mxu0 0.0
    %400 = vmatpush1.msra.mxu0 0.0
    %401 = vmatprep.subr.mxu0 0.0
    %402 = vmatpush1.msra.mxu0 0.0
    %403 = vmatprep.subr.mxu0 0.0
    %404 = vmatpush1.msra.mxu0 0.0
    %405 = vmatprep.subr.mxu0 0.0
    %406 = vmatpush1.msra.mxu0 0.0
    %407 = vmatprep.subr.mxu0 0.0
    %408 = vmatpush1.msra.mxu0 0.0
    %409 = vmatprep.subr.mxu0 0.0
    %410 = vmatpush1.msra.mxu0 0.0
    %411 = vmatprep.subr.mxu0 0.0
    %412 = vmatpush1.msra.mxu0 0.0
    %413 = vmatprep.subr.mxu0 0.0
    %414 = vmatpush1.msra.mxu0 0.0
    %415 = vmatprep.subr.mxu0 0.0
    %416 = vmatpush1.msra.mxu0 0.0
    %417 = vmatprep.subr.mxu0 0.0
    %418 = vmatpush1.msra.mxu0 0.0
    %419 = vmatprep.subr.mxu0 0.0
    %420 = vmatpush1.msra.mxu0 0.0
    %421 = vmatprep.subr.mxu0 0.0
    %422 = vmatpush1.msra.mxu0 0.0
    %423 = vmatprep.subr.mxu0 0.0
    %424 = vmatpush1.msra.mxu0 0.0
    %425 = vmatprep.subr.mxu0 0.0
    %426 = vmatpush1.msra.mxu0 0.0
    %427 = vmatprep.subr.mxu0 0.0
    %428 = vmatpush1.msra.mxu0 0.0
    %429 = vmatprep.subr.mxu0 0.0
    %430 = vmatpush1.msra.mxu0 0.0
    %431 = vmatprep.subr.mxu0 0.0
    %432 = vmatpush1.msra.mxu0 0.0
    %433 = vmatprep.subr.mxu0 0.0
    %434 = vmatpush1.msra.mxu0 0.0
    %435 = vmatprep.subr.mxu0 0.0
    %436 = vmatpush1.msra.mxu0 0.0
    %437 = vmatprep.subr.mxu0 0.0
    %438 = vmatpush1.msra.mxu0 0.0
    %439 = vmatprep.subr.mxu0 0.0
    %440 = vmatpush1.msra.mxu0 0.0
    %441 = vmatprep.subr.mxu0 0.0
    %442 = vmatpush1.msra.mxu0 0.0
    %443 = vmatprep.subr.mxu0 0.0
    %444 = vmatpush1.msra.mxu0 0.0
    %445 = vmatprep.mubr.f32.mxu0 0.0
    %446 = vmatmul.mubr.f32.gmra.mrb[0].mxu0 %v379
    %v447 = vpop.f32.mrb[0].mxu0
    %v448 = vadd.f32 %v375, %v447
    %v449 = vpop.f32.mrb[0].mxu0
    %450 = vdwg.mxu0
    %v451 = vmax.f32 %v448, 0.0
    %v453 = vrot.slane %v25, 2
    %v455 = vmul.f32 %v448, %v453
    %v456 = vsub.f32 %v451, %v455
    %v457 = vand.u32 2147483647, %v448
    %v458 = vsub.f32 0.0, %v457
    %v459 = vmul.f32 %v458, 1.442695
    %v460 = vpow.pop %v459
    %v461 = vadd.f32 %v460, 1.0
    %v462 = vlog2.pop %v461
    %v463 = vmul.f32 %v462, 0.6931472
    %v464 = vmul.f32 -0.5, %v460
    %v465 = vadd.f32 %v464, 1.0
    %v466 = vmul.f32 %v465, %v460
    %v467 = vand.u32 2147483647, %v460
    %vm468 = vcmp.lt.f32.partialorder %v467, 0.0004427343
    %v469 = vsel %vm468, %v466, %v463
    %v470 = vadd.f32 %v456, %v469
    %vm471 = vcmask 57344
    %v472 = vsel %vm471, %v470, 0.0
    %473 = vadd.xlane.f32.xlu0 %v472
    %v474 = vpop.xlane.xlu0 %473
    %v475 = vrot.slane %v474, 4
    %v476 = vadd.f32 %v474, %v475
    %v477 = vrot.slane %v476, 2
    %v478 = vadd.f32 %v476, %v477
    %v479 = vrot.slane %v478, 1
    %v480 = vadd.f32 %v478, %v479
    %s481 = vtos %v480
    %v482 = vrcp.pop 8.0
    %s483 = vtos %v482
    %s484 = smul.f32 %s481, %s483
    %s485 = scalar_lea.smem [#allocation2], 0
    %486 = sst [smem:[%s485]] %s484
    %vm487 = vcmp.gt.f32.partialorder %v448, 0.0
    %v488 = vsel %vm487, 1, 0
    %v489 = vcvt.s32.f32 %v488
    %vm490 = vcmp.eq.f32.partialorder %v489, %v453
    %v491 = vsel %vm490, 1, 0
    %v492 = vcvt.s32.f32 %v491
    %493 = vst.msk [vmem:[#allocation5] sm:$0x1] %vm471, %v492
    // Predicated region
    $region22: #{hier_superviser_forward.1} parent=1 // pred_check
      _
    $region23: #{hier_superviser_forward.1} parent=1 // pred_check_branch
      %495 = sbr.rel (0) target = $region25
    $region24: #{hier_superviser_forward.1} parent=1 // pred_region
      %s497 = ssub.s32 16, 16
      %498 = vsyncadd [#allocation4], %s497
      %501 = dma.smem_to_hbm [#allocation2], 16, %s5, [#allocation4]
    $region25: #{hier_superviser_forward.1} parent=1 // pred_fallthru
      _
    // Predicated region
    $region26: #{hier_superviser_forward.1} parent=1 // pred_check
      _
    $region27: #{hier_superviser_forward.1} parent=1 // pred_check_branch
      %503 = sbr.rel (0) target = $region29
    $region28: #{hier_superviser_forward.1} parent=1 // pred_region
      %s505 = ssub.s32 16, 16
      %506 = vsyncadd [#allocation3], %s505
      %s508 = sshll.u32 [#allocation5], 4
      %s509 = int_to_ptr.vmem [resolvable:$true] %s508
      %511 = dma.vmem_to_hbm [thread:$0]  %s509, 16, %s6, [#allocation3]
    $region29: #{hier_superviser_forward.1} parent=1 // pred_fallthru
      _
    // Predicated region
    $region30: #{hier_superviser_forward.1} parent=1 // pred_check
      _
    $region31: #{hier_superviser_forward.1} parent=1 // pred_check_branch
      %513 = sbr.rel (0) target = $region33
    $region32: #{hier_superviser_forward.1} parent=1 // pred_region
      %514 = dma.done [#allocation4], 16
    $region33: #{hier_superviser_forward.1} parent=1 // pred_fallthru
      _
    // Predicated region
    $region34: #{hier_superviser_forward.1} parent=1 // pred_check
      _
    $region35: #{hier_superviser_forward.1} parent=1 // pred_check_branch
      %516 = sbr.rel (0) target = $region37
    $region36: #{hier_superviser_forward.1} parent=1 // pred_region
      %517 = dma.done [#allocation3], 16
    $region37: #{hier_superviser_forward.1} parent=1 // pred_fallthru
      _
    %518 = sfence
    %519 = vsyncpa [#allocation3], 1
    %520 = vsyncpa [#allocation4], 1

</llo_original>
